<compile_context>
chip_gen: v5e
topology: v5e:2x2
jax: 0.10.0
libtpu: 0.0.40
codegen_flags: <defaults>
</compile_context>

<pallas_src>
import functools

import jax
import jax.numpy as jnp
from jax.experimental import pallas as pl
from jax.experimental.pallas import tpu as pltpu


# ---------------------------------------------------------------------------
# Pallas kernels
# ---------------------------------------------------------------------------

def _conv_matmul_kernel(x_ref, w_ref, b_ref, o_ref):
    """One K-merged MXU matmul per row tile.

    x_ref : (TM, 9*Cin)   bf16   im2col rows for TM output pixels
    w_ref : (9*Cin, Cout) bf16   resident weight matrix
    b_ref : (1, Cout)     f32
    o_ref : (TM, Cout)    f32
    """
    acc = jnp.dot(x_ref[...], w_ref[...], preferred_element_type=jnp.float32)
    o_ref[...] = (acc + b_ref[...]).astype(o_ref.dtype)


def _avg_pool_kernel(x_ref, o_ref):
    """2x2 / stride-2 average pool on a row tile, straight from NHWC input.

    x_ref : (1, 2*TH, 2*Wout, C)
    o_ref : (1, TH, Wout, C)
    """
    _, th, wout, c = o_ref.shape
    x = x_ref[0].astype(jnp.float32)          # (2*TH, 2*Wout, C)
    x = x.reshape(th, 2, 2 * wout, c)         # leading-dim split: no relayout
    rows = x[:, 0, :, :] + x[:, 1, :, :]      # sum adjacent row pairs -> (TH, 2*Wout, C)
    # (2*Wout, C) -> (Wout, 2*C) is a contiguous reinterpretation (lane-merge),
    # avoiding a tiny-sublane intermediate; column pairs become lane halves.
    y = rows.reshape(th, wout, 2 * c)
    cols = y[:, :, :c] + y[:, :, c:]          # even + odd columns
    o_ref[0] = (0.25 * cols).astype(o_ref.dtype)


# ---------------------------------------------------------------------------
# Helpers
# ---------------------------------------------------------------------------

def _vmem_cap_bytes():
    """Physical VMEM of this generation (fallback: v7x-sized 64 MiB)."""
    try:
        return int(pltpu.get_tpu_info().vmem_capacity_bytes)
    except Exception:
        return 64 << 20


def _conv_im2col_nhwc(x_nhwc, hout, wout):
    """(B, H, W, C) -> (B*Hout*Wout, 9*C) bf16 im2col in one fused XLA pass.

    Column order is (kh, kw, cin) to match the pre-reshaped weight matrix.
    Zero-padding on the bottom/right reproduces F.pad(x, (0,1,0,1)).
    """
    B, H, W, C = x_nhwc.shape
    xp = jnp.pad(x_nhwc.astype(jnp.bfloat16),
                 ((0, 0), (0, 2 * hout + 1 - H), (0, 2 * wout + 1 - W), (0, 0)))
    taps = [xp[:, dh:dh + 2 * hout:2, dw:dw + 2 * wout:2, :]
            for dh in range(3) for dw in range(3)]
    return jnp.concatenate(taps, axis=-1).reshape(B * hout * wout, 9 * C)


# ---------------------------------------------------------------------------
# NHWC core implementations
# ---------------------------------------------------------------------------

def downsample_conv_nhwc(x_nhwc, w_mat, b):
    """x_nhwc: (B, H, W, Cin); w_mat: (9*Cin, Cout) bf16; b: (Cout,) f32
    -> (B, Hout, Wout, Cout) f32."""
    B, H, W, C = x_nhwc.shape
    hout, wout = H // 2, W // 2
    K, cout = w_mat.shape
    M = B * hout * wout

    col = _conv_im2col_nhwc(x_nhwc, hout, wout)            # (M, K) bf16

    # Row tile: 128..512 rows, sized so the bf16 input block stays ~<=2 MiB.
    if M <= 512:
        TM = M                                             # full dim -> always legal
    else:
        TM = 512 if K * 512 * 2 <= (2 << 20) else 256      # multiples of 8
    grid = (pl.cdiv(M, TM),)

    # Explicit, generation-aware VMEM budget with headroom (<=~48 MiB on v7x,
    # <=~96 MiB on v5e/v6e).  Weight + bias are double-buffered by default even
    # though their index map is constant; at <=4.7 MiB that is acceptable.
    x_bytes = TM * K * 2
    w_bytes = K * cout * 2
    o_bytes = TM * cout * 4
    need = 2 * (x_bytes + o_bytes) + 2 * (w_bytes + 4 * cout)
    vmem_limit = int(min(max(2 * need + (8 << 20), 32 << 20),
                         (3 * _vmem_cap_bytes()) // 4))

    out = pl.pallas_call(
        _conv_matmul_kernel,
        out_shape=jax.ShapeDtypeStruct((M, cout), jnp.float32),
        grid=grid,
        in_specs=[pl.BlockSpec((TM, K), lambda m: (m, 0)),
                  pl.BlockSpec((K, cout), lambda m: (0, 0)),
                  pl.BlockSpec((1, cout), lambda m: (0, 0))],
        out_specs=pl.BlockSpec((TM, cout), lambda m: (m, 0)),
        compiler_params=pltpu.CompilerParams(
            dimension_semantics=("parallel",),
            vmem_limit_bytes=vmem_limit),
    )(col, w_mat, b.reshape(1, cout).astype(jnp.float32))

    return out.reshape(B, hout, wout, cout)                # contiguous -> free


def downsample_avgpool_nhwc(x_nhwc):
    """x_nhwc: (B, H, W, C) -> (B, Hout, Wout, C), same dtype."""
    B, H, W, C = x_nhwc.shape
    hout, wout = H // 2, W // 2
    x_even = x_nhwc[:, :2 * hout, :2 * wout, :]            # floor semantics

    # Row tiling keeps blocks a few MiB regardless of image size / channels.
    row_bytes = 2 * 2 * wout * C * x_nhwc.dtype.itemsize
    TH = max(1, min(hout, (4 << 20) // max(row_bytes, 1)))
    grid = (B, pl.cdiv(hout, TH))

    out = pl.pallas_call(
        _avg_pool_kernel,
        out_shape=jax.ShapeDtypeStruct((B, hout, wout, C), x_nhwc.dtype),
        grid=grid,
        in_specs=[pl.BlockSpec((1, 2 * TH, 2 * wout, C), lambda b, t: (b, t, 0, 0))],
        out_specs=pl.BlockSpec((1, TH, wout, C), lambda b, t: (b, t, 0, 0)),
        compiler_params=pltpu.CompilerParams(
            dimension_semantics=("parallel", "parallel")),
    )(x_even)
    return out


# ---------------------------------------------------------------------------
# NCHW (PyTorch-interface) wrappers: one layout pass in, one out.
# ---------------------------------------------------------------------------

def downsample_conv(x, w_mat, b):
    """x: (B, Cin, H, W) f32 -> (B, Cout, H//2, W//2) f32."""
    y = downsample_conv_nhwc(x.transpose(0, 2, 3, 1), w_mat, b)
    return y.transpose(0, 3, 1, 2)


def downsample_avgpool(x):
    y = downsample_avgpool_nhwc(x.transpose(0, 2, 3, 1))
    return y.transpose(0, 3, 1, 2)


# ---------------------------------------------------------------------------
# Module: params + forward
# ---------------------------------------------------------------------------

def init_downsample_params(key, in_channels):
    """Conv2d(in_channels, in_channels, kernel_size=3, stride=2, padding=0)."""
    kw, kb = jax.random.split(key)
    fan_in = in_channels * 9
    w = jax.random.normal(kw, (in_channels, in_channels, 3, 3), jnp.float32) / jnp.sqrt(fan_in)
    b = 0.01 * jax.random.normal(kb, (in_channels,), jnp.float32)
    # Pre-reshaped matmul weight, built once:
    # (Cout,Cin,3,3) -> (kh,kw,Cin,Cout) -> (9*Cin, Cout) bf16  (matches im2col order)
    w_mat = w.transpose(2, 3, 1, 0).reshape(9 * in_channels, in_channels).astype(jnp.bfloat16)
    return {"w": w, "b": b, "w_mat": w_mat}


def downsample_forward(x, params, *, with_conv):
    if with_conv:
        return downsample_conv(x, params["w_mat"], params["b"])
    return downsample_avgpool(x)


# ---------------------------------------------------------------------------
# Pure-XLA references (for correctness check only)
# ---------------------------------------------------------------------------

def _conv_reference(x, w, b):
    xp = jnp.pad(x, ((0, 0), (0, 0), (0, 1), (0, 1)))
    y = jax.lax.conv_general_dilated(
        xp, w, window_strides=(2, 2), padding="VALID",
        dimension_numbers=("NCHW", "OIHW", "NCHW"),
        preferred_element_type=jnp.float32)
    return y + b[None, :, None, None]


def _avgpool_reference(x):
    B, C, H, W = x.shape
    return x[:, :, :2 * (H // 2), :2 * (W // 2)].reshape(
        B, C, H // 2, 2, W // 2, 2).mean(axis=(3, 5))


if __name__ == "__main__":
    B, C, H, W = 2, 4, 16, 16
    key = jax.random.PRNGKey(0)
    kx, kp = jax.random.split(key)
    x = jax.random.normal(kx, (B, C, H, W), jnp.float32)
    params = init_downsample_params(kp, C)

    conv_fwd = jax.jit(functools.partial(downsample_forward, with_conv=True))
    pool_fwd = jax.jit(functools.partial(downsample_forward, with_conv=False))

    y_conv = jax.block_until_ready(conv_fwd(x, params))
    y_pool = jax.block_until_ready(pool_fwd(x, params))

    assert y_conv.shape == (B, C, H // 2, W // 2), y_conv.shape
    assert y_pool.shape == (B, C, H // 2, W // 2), y_pool.shape
    assert bool(jnp.all(jnp.isfinite(y_conv)))
    assert bool(jnp.all(jnp.isfinite(y_pool)))

    # Numerical parity with PyTorch semantics (loose tol for the bf16 MXU path).
    ref_conv = _conv_reference(x, params["w"], params["b"])
    ref_pool = _avgpool_reference(x)
    assert float(jnp.max(jnp.abs(y_conv - ref_conv))) < 5e-2
    assert float(jnp.max(jnp.abs(y_pool - ref_pool))) < 1e-5

    print("KERNEL_OK")
</pallas_src>

<mosaic_0001>
module attributes {stable_mosaic.version = 11 : i64} {
  func.func @_conv_matmul_kernel(%arg0: i32, %arg1: memref<128x36xbf16, #tpu.memory_space<vmem>>, %arg2: memref<36x4xbf16, #tpu.memory_space<vmem>>, %arg3: memref<1x4xf32, #tpu.memory_space<vmem>>, %arg4: memref<128x4xf32, #tpu.memory_space<vmem>>) attributes {dimension_semantics = [#tpu.dimension_semantics<parallel>], iteration_bounds = array<i64: 1>, scalar_prefetch = 0 : i64, scratch_operands = 0 : i64, tpu.core_type = #tpu.core_type<tc>, window_params = [{transform_indices = @transform_0, window_bounds = array<i64: 128, 36>}, {pipeline_mode = #tpu.pipeline_mode<synchronous>, transform_indices = @transform_1, window_bounds = array<i64: 36, 4>}, {pipeline_mode = #tpu.pipeline_mode<synchronous>, transform_indices = @transform_2, window_bounds = array<i64: 1, 4>}, {transform_indices = @transform_3, window_bounds = array<i64: 128, 4>}]} {
    %c0 = arith.constant 0 : index
    %c0_0 = arith.constant 0 : index
    %0 = vector.load %arg1[%c0, %c0_0] : memref<128x36xbf16, #tpu.memory_space<vmem>>, vector<128x36xbf16>
    %c0_1 = arith.constant 0 : index
    %c0_2 = arith.constant 0 : index
    %1 = vector.load %arg2[%c0_1, %c0_2] : memref<36x4xbf16, #tpu.memory_space<vmem>>, vector<36x4xbf16>
    %cst = arith.constant dense<0.000000e+00> : vector<128x4xf32>
    %2 = tpu.matmul %0, %1, %cst {dimension_numbers = #tpu.dot_dimension_numbers<[1], [0], [0], [1], [0, 0, 1, 1], [], []>} : vector<128x36xbf16>, vector<36x4xbf16>, vector<128x4xf32> -> vector<128x4xf32>
    %c0_3 = arith.constant 0 : index
    %c0_4 = arith.constant 0 : index
    %3 = vector.load %arg3[%c0_3, %c0_4] : memref<1x4xf32, #tpu.memory_space<vmem>>, vector<1x4xf32>
    %4 = vector.broadcast %3 : vector<1x4xf32> to vector<128x4xf32>
    %5 = arith.addf %2, %4 : vector<128x4xf32>
    %c0_5 = arith.constant 0 : index
    %c0_6 = arith.constant 0 : index
    %6 = vector.load %arg4[%c0_5, %c0_6] : memref<128x4xf32, #tpu.memory_space<vmem>>, vector<128x4xf32>
    tpu.vector_store %arg4[%c0_5, %c0_6], %5 {strides = array<i32>} : memref<128x4xf32, #tpu.memory_space<vmem>>, vector<128x4xf32>,
    return
  }
  func.func @transform_0(%arg0: i32) -> (i32, i32) {
    %c0_i32 = arith.constant 0 : i32
    %c0_i32_0 = arith.constant 0 : i32
    return %arg0, %c0_i32 : i32, i32
  }
  func.func @transform_1(%arg0: i32) -> (i32, i32) {
    %c0_i32 = arith.constant 0 : i32
    %c0_i32_0 = arith.constant 0 : i32
    %c0_i32_1 = arith.constant 0 : i32
    return %c0_i32, %c0_i32_0 : i32, i32
  }
  func.func @transform_2(%arg0: i32) -> (i32, i32) {
    %c0_i32 = arith.constant 0 : i32
    %c0_i32_0 = arith.constant 0 : i32
    %c0_i32_1 = arith.constant 0 : i32
    return %c0_i32, %c0_i32_0 : i32, i32
  }
  func.func @transform_3(%arg0: i32) -> (i32, i32) {
    %c0_i32 = arith.constant 0 : i32
    %c0_i32_0 = arith.constant 0 : i32
    return %arg0, %c0_i32 : i32, i32
  }
}

</mosaic_0001>

<llo_original>
// kernel: downsample_forward.1
$region0: #{downsample_forward.1}
  #allocation0 [shape = 'u32[]', space=smem, size = 0x4, offset = 0x4, fixed_abs, tag = 'smem constant byte address 0x4 - core index']
  #allocation1 [shape = 'u32[72,128]{1,0:T(1,128)}', space=vmem, size = 0x9000, scoped, tag = 'internal scratch']
  %s0 = inlined_call_operand.vmem [shape: bf16[128,36], index: 0, kind: input, shape index: {}]
  %s1 = inlined_call_operand.vmem [shape: bf16[36,4], index: 1, kind: input, shape index: {}]
  %s2 = inlined_call_operand.vmem [shape: f32[1,4], index: 2, kind: input, shape index: {}]
  %s3 = inlined_call_operand.vmem [shape: f32[128,4], index: 3, kind: output, shape index: {}]
  %s4 = sld [smem:[#allocation0]]
  $region22: #{downsample_forward.1} parent=0
    _
  %s6 = ssub.s32 1, %s4
  %s7 = scalar_select 0, %s6, %s4
  // Predicated region
  $region2: #{downsample_forward.1} parent=0 // pred_check
    _
  $region3: #{downsample_forward.1} parent=0 // pred_check_branch
    %9 = sbr.rel (0) target = $region5
  $region4: #{downsample_forward.1} parent=0 // pred_region
    _
  $region5: #{downsample_forward.1} parent=0 // pred_fallthru
    _
  // Predicated region
  $region6: #{downsample_forward.1} parent=0 // pred_check
    _
  $region7: #{downsample_forward.1} parent=0 // pred_check_branch
    %11 = sbr.rel (0) target = $region9
  $region8: #{downsample_forward.1} parent=0 // pred_region
    _
  $region9: #{downsample_forward.1} parent=0 // pred_fallthru
    _
  // Predicated region
  $region10: #{downsample_forward.1} parent=0 // pred_check
    _
  $region11: #{downsample_forward.1} parent=0 // pred_check_branch
    %13 = sbr.rel (0) target = $region13
  $region12: #{downsample_forward.1} parent=0 // pred_region
    _
  $region13: #{downsample_forward.1} parent=0 // pred_fallthru
    _
  %v15 = vld [vmem:[%s0] sm:$0xf]
  %v16 = vld [vmem:[%s0 + $0x4] sm:$0xf]
  %v17 = vld [vmem:[%s0 + $0x8] sm:$0xf]
  %v18 = vld [vmem:[%s0 + $0xc] sm:$0xf]
  %v19 = vld [vmem:[%s0 + $0x10] sm:$0xf]
  %v20 = vld [vmem:[%s0 + $0x14] sm:$0xf]
  %v21 = vld [vmem:[%s0 + $0x18] sm:$0xf]
  %v22 = vld [vmem:[%s0 + $0x1c] sm:$0xf]
  %v23 = vld [vmem:[%s0 + $0x20] sm:$0xf]
  %v24 = vld [vmem:[%s0 + $0x24] sm:$0xf]
  %v25 = vld [vmem:[%s0 + $0x28] sm:$0xf]
  %v26 = vld [vmem:[%s0 + $0x2c] sm:$0xf]
  %v27 = vld [vmem:[%s0 + $0x30] sm:$0xf]
  %v28 = vld [vmem:[%s0 + $0x34] sm:$0xf]
  %v29 = vld [vmem:[%s0 + $0x38] sm:$0xf]
  %v30 = vld [vmem:[%s0 + $0x3c] sm:$0xf]
  %v31 = vld [vmem:[%s1] sm:$0xf]
  %v32 = vld [vmem:[%s1 + $0x4] sm:$0xf]
  %v33 = vld [vmem:[%s1 + $0x8] sm:$0xf]
  %v34 = vld [vmem:[%s1 + $0xc] sm:$0xf]
  %v35 = vld [vmem:[%s1 + $0x10] sm:$0x3]
  %v36 = vld [vmem:[%s2] sm:$0x1]
  %v38 = vperm.slane %v36, 0
  %v56 = vunpack.c.l.b16 %v15
  %v57 = vunpack.c.l.b16 %v16
  %v58 = vunpack.c.l.b16 %v17
  %v59 = vunpack.c.l.b16 %v18
  %v60 = vunpack.c.l.b16 %v19
  %v61 = vunpack.c.l.b16 %v20
  %v62 = vunpack.c.l.b16 %v21
  %v63 = vunpack.c.l.b16 %v22
  %v64 = vunpack.c.l.b16 %v23
  %v65 = vunpack.c.l.b16 %v24
  %v66 = vunpack.c.l.b16 %v25
  %v67 = vunpack.c.l.b16 %v26
  %v68 = vunpack.c.l.b16 %v27
  %v69 = vunpack.c.l.b16 %v28
  %v70 = vunpack.c.l.b16 %v29
  %v71 = vunpack.c.l.b16 %v30
  %v72 = vpack.c.b16 %v57, %v56
  %v73 = vpack.c.b16 %v59, %v58
  %v74 = vpack.c.b16 %v61, %v60
  %v75 = vpack.c.b16 %v63, %v62
  %v76 = vpack.c.b16 %v65, %v64
  %v77 = vpack.c.b16 %v67, %v66
  %v78 = vpack.c.b16 %v69, %v68
  %v79 = vpack.c.b16 %v71, %v70
  %v85 = vunpack.c.l.b16 %v31
  %v86 = vunpack.c.l.b16 %v32
  %v87 = vunpack.c.l.b16 %v33
  %v88 = vunpack.c.l.b16 %v34
  %v89 = vunpack.c.l.b16 %v35
  %v90 = vpack.c.b16 %v86, %v85
  %v91 = vpack.c.b16 %v88, %v87
  %v92 = vpack.c.b16 %v89, %v89
  %vm95 = vcmask 293888
  %v97 = vsel %vm95, %v72, 0
  %v100 = vsel %vm95, %v73, 0
  %v103 = vsel %vm95, %v74, 0
  %v106 = vsel %vm95, %v75, 0
  %v109 = vsel %vm95, %v76, 0
  %v112 = vsel %vm95, %v77, 0
  %v115 = vsel %vm95, %v78, 0
  %v118 = vsel %vm95, %v79, 0
  %vm120 = vcmask 1041408
  %v122 = vsel %vm120, %v92, 0
  %124 = vmatpush.bf16.msra.mxu0 0
  %125 = vmatpush.bf16.msra.mxu0 0
  %126 = vmatpush.bf16.msra.mxu0 0
  %127 = vmatpush.bf16.msra.mxu0 0
  %128 = vmatpush.bf16.msra.mxu0 0
  %129 = vmatpush.bf16.msra.mxu0 %v122
  %130 = vmatpush.bf16.msra.mxu0 %v91
  %131 = vmatpush.bf16.msra.mxu0 %v90
  %132 = vmatmul.bf16.gmra.mxu0 %v97
  %v133 = vpop.f32.mrf.mxu0
  %v134 = vadd.f32 %v38, %v133
  %v135 = vpop.f32.mrf.mxu0
  %v136 = vadd.f32 %v38, %v135
  %137 = vmatmul.bf16.gmra.mxu0 %v100
  %v138 = vpop.f32.mrf.mxu0
  %v139 = vadd.f32 %v38, %v138
  %v140 = vpop.f32.mrf.mxu0
  %v141 = vadd.f32 %v38, %v140
  %142 = vmatmul.bf16.gmra.mxu0 %v103
  %v143 = vpop.f32.mrf.mxu0
  %v144 = vadd.f32 %v38, %v143
  %v145 = vpop.f32.mrf.mxu0
  %v146 = vadd.f32 %v38, %v145
  %147 = vmatmul.bf16.gmra.mxu0 %v106
  %v148 = vpop.f32.mrf.mxu0
  %v149 = vadd.f32 %v38, %v148
  %v150 = vpop.f32.mrf.mxu0
  %v151 = vadd.f32 %v38, %v150
  %152 = vmatmul.bf16.gmra.mxu0 %v109
  %v153 = vpop.f32.mrf.mxu0
  %v154 = vadd.f32 %v38, %v153
  %v155 = vpop.f32.mrf.mxu0
  %v156 = vadd.f32 %v38, %v155
  %157 = vmatmul.bf16.gmra.mxu0 %v112
  %v158 = vpop.f32.mrf.mxu0
  %v159 = vadd.f32 %v38, %v158
  %v160 = vpop.f32.mrf.mxu0
  %v161 = vadd.f32 %v38, %v160
  %162 = vmatmul.bf16.gmra.mxu0 %v115
  %v163 = vpop.f32.mrf.mxu0
  %v164 = vadd.f32 %v38, %v163
  %v165 = vpop.f32.mrf.mxu0
  %v166 = vadd.f32 %v38, %v165
  %167 = vmatmul.bf16.gmra.mxu0 %v118
  %v168 = vpop.f32.mrf.mxu0
  %v169 = vadd.f32 %v38, %v168
  %v170 = vpop.f32.mrf.mxu0
  %v171 = vadd.f32 %v38, %v170
  %172 = vdwg.mxu0
  %vm173 = vcmask 31744
  %174 = vst.msk [vmem:[%s3] sm:$0xff] %vm173, %v134
  %175 = vst.msk [vmem:[%s3 + $0x8] sm:$0xff] %vm173, %v136
  %176 = vst.msk [vmem:[%s3 + $0x10] sm:$0xff] %vm173, %v139
  %177 = vst.msk [vmem:[%s3 + $0x18] sm:$0xff] %vm173, %v141
  %178 = vst.msk [vmem:[%s3 + $0x20] sm:$0xff] %vm173, %v144
  %179 = vst.msk [vmem:[%s3 + $0x28] sm:$0xff] %vm173, %v146
  %180 = vst.msk [vmem:[%s3 + $0x30] sm:$0xff] %vm173, %v149
  %181 = vst.msk [vmem:[%s3 + $0x38] sm:$0xff] %vm173, %v151
  %182 = vst.msk [vmem:[%s3 + $0x40] sm:$0xff] %vm173, %v154
  %183 = vst.msk [vmem:[%s3 + $0x48] sm:$0xff] %vm173, %v156
  %184 = vst.msk [vmem:[%s3 + $0x50] sm:$0xff] %vm173, %v159
  %185 = vst.msk [vmem:[%s3 + $0x58] sm:$0xff] %vm173, %v161
  %186 = vst.msk [vmem:[%s3 + $0x60] sm:$0xff] %vm173, %v164
  %187 = vst.msk [vmem:[%s3 + $0x68] sm:$0xff] %vm173, %v166
  %188 = vst.msk [vmem:[%s3 + $0x70] sm:$0xff] %vm173, %v169
  %189 = vst.msk [vmem:[%s3 + $0x78] sm:$0xff] %vm173, %v171
  // Predicated region
  $region14: #{downsample_forward.1} parent=0 // pred_check
    _
  $region15: #{downsample_forward.1} parent=0 // pred_check_branch
    %191 = sbr.rel (0) target = $region17
  $region16: #{downsample_forward.1} parent=0 // pred_region
    _
  $region17: #{downsample_forward.1} parent=0 // pred_fallthru
    _
  // Predicated region
  $region18: #{downsample_forward.1} parent=0 // pred_check
    _
  $region19: #{downsample_forward.1} parent=0 // pred_check_branch
    %193 = sbr.rel (0) target = $region21
  $region20: #{downsample_forward.1} parent=0 // pred_region
    _
  $region21: #{downsample_forward.1} parent=0 // pred_fallthru
    _

</llo_original>
